<compile_context>
chip_gen: v6e
topology: v6e:2x2x1
jax: 0.10.0
libtpu: 0.0.40
codegen_flags: <defaults>
</compile_context>

<pallas_src>
import jax
import jax.numpy as jnp
from jax.experimental import pallas as pl
from jax.experimental.pallas import tpu as pltpu


def _round_up(v, m):
    return ((v + m - 1) // m) * m


def _cdiv(a, b):
    return (a + b - 1) // b


# ---------------------------------------------------------------------------
# Kernels
# ---------------------------------------------------------------------------
def _pff_kernel(x_ref, w_ref, b_ref, o_ref):
    # x_ref: (TILE_M, d_in), w_ref: (d_in, TILE_N), b_ref: (1, TILE_N) f32
    acc = jnp.dot(x_ref[...], w_ref[...], preferred_element_type=jnp.float32)
    o_ref[...] = (acc + b_ref[...]).astype(o_ref.dtype)


def _pff_kernel_ksplit(x_ref, w_ref, b_ref, o_ref, acc_ref):
    # Grid = (i, j, k); k is the d_in reduction axis (innermost, "arbitrary").
    k = pl.program_id(2)

    @pl.when(k == 0)
    def _():
        acc_ref[...] = jnp.zeros_like(acc_ref)

    acc_ref[...] += jnp.dot(x_ref[...], w_ref[...],
                            preferred_element_type=jnp.float32)

    @pl.when(k == pl.num_programs(2) - 1)
    def _():
        o_ref[...] = (acc_ref[...] + b_ref[...]).astype(o_ref.dtype)


# ---------------------------------------------------------------------------
# Wrapper
# ---------------------------------------------------------------------------
def _vmem_capacity_bytes():
    try:
        return int(pltpu.get_tpu_info().vmem_capacity_bytes)
    except Exception:
        return None


def position_feed_forward(x, weight, bias, *, compute_dtype=None,
                          vmem_budget_bytes=None):
    """PositionFeedForward forward pass.

    Args:
        x:      (N, L, d_in) activations (f32 or bf16).
        weight: (d_out, d_in) Conv1d kernel (kernel-size-1 squeezed).
        bias:   (d_out,) Conv1d bias.
        compute_dtype: optional lower-precision matmul input dtype (e.g.
            jnp.bfloat16) for the HBM-bound regime; accumulation stays f32 and
            the output dtype stays x.dtype.
        vmem_budget_bytes: optional override of the working-set budget
            (testing / tuning).

    Returns:
        (N, L, d_out), same dtype as x.
    """
    N, L, d_in_orig = x.shape
    d_out = weight.shape[0]
    M = N * L

    out_dtype = x.dtype
    cdtype = jnp.dtype(compute_dtype) if compute_dtype is not None else jnp.dtype(x.dtype)
    bx = cdtype.itemsize

    # ---- generation-aware VMEM budget ---------------------------------------
    cap = _vmem_capacity_bytes()
    if vmem_budget_bytes is not None:
        budget = int(vmem_budget_bytes)
    elif cap is not None and cap >= (96 << 20):
        budget = 64 << 20          # v5e / v6e: 128 MiB physical VMEM per TC
    else:
        budget = 28 << 20          # v7x (64 MiB per TC) or unknown: conservative

    sub = 16 if cdtype == jnp.bfloat16 else 8

    # ---- column (d_out) tiling: keep the whole weight resident if it fits ----
    if d_out <= 512 or 2 * bx * d_in_orig * d_out <= budget // 2:
        TILE_N = d_out             # full extent -> weight/bias DMA'd exactly once
    else:
        TILE_N = 512               # lane-dense multiple of 128
    gj = _cdiv(d_out, TILE_N)

    # ---- row / reduction tiling ----------------------------------------------
    def ws_nok(tm, tk):            # double-buffered x / w / b / out tiles
        return (2 * bx * tm * tk + 2 * bx * tk * TILE_N
                + 2 * 4 * TILE_N + 2 * bx * tm * TILE_N)

    def ws_k(tm, tk):              # + f32 accumulator scratch
        return ws_nok(tm, tk) + 4 * tm * TILE_N

    TILE_M = min(1024, _round_up(M, sub))
    TILE_K, nk = d_in_orig, 1
    while True:
        if ws_nok(TILE_M, d_in_orig) <= budget:
            TILE_K, nk = d_in_orig, 1
            break
        # Prefer splitting the reduction (d_in) axis over shrinking the row tile.
        found = False
        for tk in (2048, 1024, 512, 256, 128):
            if tk < d_in_orig and ws_k(TILE_M, tk) <= budget:
                TILE_K, nk = tk, _cdiv(d_in_orig, tk)
                found = True
                break
        if found:
            break
        if TILE_M <= sub:
            TILE_K, nk = d_in_orig, 1    # give up; compiler limit absorbs it
            break
        TILE_M = max(sub, _round_up(TILE_M // 2, sub))

    # ---- wrapper-side prep (reshapes only; no pad / slice HBM passes) --------
    x2d = x.reshape(M, d_in_orig)
    w_t = weight.T                                     # (d_in, d_out)
    if x2d.dtype != cdtype:
        x2d = x2d.astype(cdtype)
    if w_t.dtype != cdtype:
        w_t = w_t.astype(cdtype)
    b2d = bias.astype(jnp.float32).reshape(1, d_out)

    d_in = d_in_orig
    if nk > 1 and d_in_orig % TILE_K != 0:
        # Rare wide-d_in case: zero-pad the reduction dim so every K tile is
        # exact (zero columns/rows contribute nothing to the accumulation).
        d_in = _round_up(d_in_orig, TILE_K)
        x2d = jnp.pad(x2d, ((0, 0), (0, d_in - d_in_orig)))
        w_t = jnp.pad(w_t, ((0, d_in - d_in_orig), (0, 0)))
        nk = d_in // TILE_K

    gi = _cdiv(M, TILE_M)

    ws = ws_k(TILE_M, TILE_K) if nk > 1 else ws_nok(TILE_M, d_in)
    vmem_limit = max(ws + (8 << 20), 32 << 20)
    if cap is not None:
        vmem_limit = min(vmem_limit, max((cap * 3) // 4, ws + (2 << 20)))

    cost = pl.CostEstimate(
        flops=2 * M * d_in_orig * d_out,
        bytes_accessed=(M * d_in_orig + d_in_orig * d_out) * bx
        + M * d_out * jnp.dtype(out_dtype).itemsize,
        transcendentals=0,
    )

    if nk == 1:
        out2d = pl.pallas_call(
            _pff_kernel,
            out_shape=jax.ShapeDtypeStruct((M, d_out), out_dtype),
            grid_spec=pl.GridSpec(
                grid=(gi, gj),
                in_specs=[
                    pl.BlockSpec((TILE_M, d_in), lambda i, j: (i, 0)),
                    # gj == 1 in the common case -> constant block index, weight
                    # and bias are DMA'd exactly once for the whole kernel.
                    pl.BlockSpec((d_in, TILE_N), lambda i, j: (0, j)),
                    pl.BlockSpec((1, TILE_N), lambda i, j: (0, j)),
                ],
                out_specs=pl.BlockSpec((TILE_M, TILE_N), lambda i, j: (i, j)),
            ),
            compiler_params=pltpu.CompilerParams(
                dimension_semantics=("parallel", "parallel"),
                vmem_limit_bytes=vmem_limit,
            ),
            cost_estimate=cost,
        )(x2d, w_t, b2d)
    else:
        out2d = pl.pallas_call(
            _pff_kernel_ksplit,
            out_shape=jax.ShapeDtypeStruct((M, d_out), out_dtype),
            grid_spec=pltpu.PrefetchScalarGridSpec(
                num_scalar_prefetch=0,
                grid=(gi, gj, nk),
                in_specs=[
                    pl.BlockSpec((TILE_M, TILE_K), lambda i, j, k: (i, k)),
                    pl.BlockSpec((TILE_K, TILE_N), lambda i, j, k: (k, j)),
                    pl.BlockSpec((1, TILE_N), lambda i, j, k: (0, j)),
                ],
                out_specs=pl.BlockSpec((TILE_M, TILE_N), lambda i, j, k: (i, j)),
                scratch_shapes=[pltpu.VMEM((TILE_M, TILE_N), jnp.float32)],
            ),
            compiler_params=pltpu.CompilerParams(
                dimension_semantics=("parallel", "parallel", "arbitrary"),
                vmem_limit_bytes=vmem_limit,
            ),
            cost_estimate=cost,
        )(x2d, w_t, b2d)

    return out2d.reshape(N, L, d_out)


def _reference(x, weight, bias):
    # Pure-JAX reference of the PyTorch forward pass.
    return jnp.einsum("nld,od->nlo", x, weight) + bias[None, None, :]


if __name__ == "__main__":
    key = jax.random.PRNGKey(0)
    kx, kw, kb = jax.random.split(key, 3)

    # 1) Small shapes matching the module forward: (N, L, d_in) -> (N, L, d_out)
    N, L, d_in, d_out = 2, 8, 32, 64
    x = jax.random.normal(kx, (N, L, d_in), dtype=jnp.float32)
    # Conv1d(d_in, d_out, 1) weight squeezed to (d_out, d_in).
    weight = jax.random.normal(kw, (d_out, d_in), dtype=jnp.float32) * 0.1
    bias = jax.random.normal(kb, (d_out,), dtype=jnp.float32) * 0.1
    # TODO(synk): spectral_norm (use_spectral_norm=True) is a training-time
    # weight reparameterization; at inference it is just a rescaled `weight`,
    # so it is not a separate kernel.
    out = position_feed_forward(x, weight, bias)
    jax.block_until_ready(out)
    assert out.shape == (N, L, d_out)
    assert jnp.allclose(out, _reference(x, weight, bias), atol=1e-5, rtol=1e-5)

    # 2) Ragged row tiles + non-multiple-of-128 d_out (no pads / slices anywhere).
    N2, L2, d_in2, d_out2 = 4, 300, 96, 192
    x2 = jax.random.normal(kx, (N2, L2, d_in2), dtype=jnp.float32)
    w2 = jax.random.normal(kw, (d_out2, d_in2), dtype=jnp.float32) * 0.05
    b2 = jax.random.normal(kb, (d_out2,), dtype=jnp.float32) * 0.05
    out2 = position_feed_forward(x2, w2, b2)
    jax.block_until_ready(out2)
    assert jnp.allclose(out2, _reference(x2, w2, b2), atol=1e-4, rtol=1e-4)

    # 3) Force the K-reduction (d_in-split) accumulator path via a small
    #    artificial VMEM budget (keeps TILE_M large instead of shrinking it).
    N3, L3, d_in3, d_out3 = 4, 128, 1024, 256
    x3 = jax.random.normal(kx, (N3, L3, d_in3), dtype=jnp.float32) * 0.1
    w3 = jax.random.normal(kw, (d_out3, d_in3), dtype=jnp.float32) * 0.03
    b3 = jax.random.normal(kb, (d_out3,), dtype=jnp.float32) * 0.03
    out3 = position_feed_forward(x3, w3, b3, vmem_budget_bytes=6 << 20)
    jax.block_until_ready(out3)
    assert jnp.allclose(out3, _reference(x3, w3, b3), atol=1e-3, rtol=1e-3)

    # 4) Optional bf16 compute path (HBM-bound kernel -> roughly half the bytes).
    out4 = position_feed_forward(x2, w2, b2, compute_dtype=jnp.bfloat16)
    jax.block_until_ready(out4)
    assert jnp.allclose(out4, _reference(x2, w2, b2), atol=5e-2, rtol=5e-2)

    print("KERNEL_OK")
</pallas_src>

<mosaic_0001>
module attributes {stable_mosaic.version = 11 : i64} {
  func.func @_pff_kernel(%arg0: i32, %arg1: i32, %arg2: memref<16x32xf32, #tpu.memory_space<vmem>>, %arg3: memref<32x64xf32, #tpu.memory_space<vmem>>, %arg4: memref<1x64xf32, #tpu.memory_space<vmem>>, %arg5: memref<16x64xf32, #tpu.memory_space<vmem>>) attributes {dimension_semantics = [#tpu.dimension_semantics<parallel>, #tpu.dimension_semantics<parallel>], iteration_bounds = array<i64: 1, 1>, scalar_prefetch = 0 : i64, scratch_operands = 0 : i64, tpu.core_type = #tpu.core_type<tc>, window_params = [{transform_indices = @transform_0, window_bounds = array<i64: 16, 32>}, {transform_indices = @transform_1, window_bounds = array<i64: 32, 64>}, {transform_indices = @transform_2, window_bounds = array<i64: 1, 64>}, {transform_indices = @transform_3, window_bounds = array<i64: 16, 64>}]} {
    %c0 = arith.constant 0 : index
    %c0_0 = arith.constant 0 : index
    %0 = vector.load %arg2[%c0, %c0_0] : memref<16x32xf32, #tpu.memory_space<vmem>>, vector<16x32xf32>
    %c0_1 = arith.constant 0 : index
    %c0_2 = arith.constant 0 : index
    %1 = vector.load %arg3[%c0_1, %c0_2] : memref<32x64xf32, #tpu.memory_space<vmem>>, vector<32x64xf32>
    %cst = arith.constant dense<0.000000e+00> : vector<16x64xf32>
    %2 = tpu.matmul %0, %1, %cst {dimension_numbers = #tpu.dot_dimension_numbers<[1], [0], [0], [1], [0, 0, 1, 1], [], []>} : vector<16x32xf32>, vector<32x64xf32>, vector<16x64xf32> -> vector<16x64xf32>
    %c0_3 = arith.constant 0 : index
    %c0_4 = arith.constant 0 : index
    %3 = vector.load %arg4[%c0_3, %c0_4] : memref<1x64xf32, #tpu.memory_space<vmem>>, vector<1x64xf32>
    %4 = vector.broadcast %3 : vector<1x64xf32> to vector<16x64xf32>
    %5 = arith.addf %2, %4 : vector<16x64xf32>
    %c0_5 = arith.constant 0 : index
    %c0_6 = arith.constant 0 : index
    %6 = vector.load %arg5[%c0_5, %c0_6] : memref<16x64xf32, #tpu.memory_space<vmem>>, vector<16x64xf32>
    tpu.vector_store %arg5[%c0_5, %c0_6], %5 {strides = array<i32>} : memref<16x64xf32, #tpu.memory_space<vmem>>, vector<16x64xf32>,
    return
  }
  func.func @transform_0(%arg0: i32, %arg1: i32) -> (i32, i32) {
    %c0_i32 = arith.constant 0 : i32
    %c0_i32_0 = arith.constant 0 : i32
    return %arg0, %c0_i32 : i32, i32
  }
  func.func @transform_1(%arg0: i32, %arg1: i32) -> (i32, i32) {
    %c0_i32 = arith.constant 0 : i32
    %c0_i32_0 = arith.constant 0 : i32
    return %c0_i32, %arg1 : i32, i32
  }
  func.func @transform_2(%arg0: i32, %arg1: i32) -> (i32, i32) {
    %c0_i32 = arith.constant 0 : i32
    %c0_i32_0 = arith.constant 0 : i32
    return %c0_i32, %arg1 : i32, i32
  }
  func.func @transform_3(%arg0: i32, %arg1: i32) -> (i32, i32) {
    %c0_i32 = arith.constant 0 : i32
    return %arg0, %arg1 : i32, i32
  }
}

</mosaic_0001>

<llo_original>
// kernel: tpu_custom_call.1
$region0: #{tpu_custom_call.1}
  #allocation0 [shape = 'u32[]', space=smem, size = 0x4, offset = 0x4, fixed_abs, tag = 'smem constant byte address 0x4 - core index']
  #allocation1 [shape = 'u32[144,128]{1,0:T(1,128)}', space=vmem, size = 0x12000, scoped, tag = 'internal scratch']
  %s0 = inlined_call_operand.hbm [shape: f32[16,32], index: 0, kind: input, shape index: {}]
  %s1 = inlined_call_operand.hbm [shape: f32[32,64], index: 1, kind: input, shape index: {}]
  %s2 = inlined_call_operand.vmem [shape: f32[1,64], index: 2, kind: input, shape index: {}]
  %s3 = inlined_call_operand.hbm [shape: f32[16,64], index: 3, kind: output, shape index: {}]
  %s4 = sld [smem:[#allocation0]]
  $region30: #{tpu_custom_call.1} parent=0
    _
  %s6 = ssub.s32 1, %s4
  %s7 = scalar_select 0, %s6, %s4
  $region1: #{tpu_custom_call.1} parent=0
    #allocation2 [shape = 'u8[8192]{0}', space=vmem, size = 0x2000, scoped, tag = 'input window, operand 0, single buffered']
    #allocation3 [shape = 's32[1]{0}', space=sflag, size = 0x4, scoped, tag = 'scoped memory for tpu_custom_call.1']
    #allocation4 [shape = 's32[1]{0}', space=sflag, size = 0x4, scoped, tag = 'scoped memory for tpu_custom_call.1']
    #allocation5 [shape = 'u8[16384]{0}', space=vmem, size = 0x4000, scoped, tag = 'input window, operand 1, single buffered']
    #allocation6 [shape = 's32[1]{0}', space=sflag, size = 0x4, scoped, tag = 'scoped memory for tpu_custom_call.1']
    #allocation7 [shape = 'u8[8192]{0}', space=vmem, size = 0x2000, scoped, tag = 'output window, operand 0, single buffered']
    %8 = vsyncpa [#allocation3], 0
    %9 = vsyncpa [#allocation6], 0
    %10 = vsyncpa [#allocation4], 0
    // Predicated region
    $region2: #{tpu_custom_call.1} parent=1 // pred_check
      _
    $region3: #{tpu_custom_call.1} parent=1 // pred_check_branch
      %12 = sbr.rel (0) target = $region5
    $region4: #{tpu_custom_call.1} parent=1 // pred_region
      %s14 = ssub.s32 256, 256
      %15 = vsyncadd [#allocation3], %s14
      %s16 = sshll.u32 [#allocation2], 4
      %s17 = int_to_ptr.vmem [resolvable:$true] %s16
      %22 = dma.hbm_to_vmem [thread:$0]  %s0, 256, %s17, [#allocation3], 128, 128, 8
    $region5: #{tpu_custom_call.1} parent=1 // pred_fallthru
      _
    // Predicated region
    $region6: #{tpu_custom_call.1} parent=1 // pred_check
      _
    $region7: #{tpu_custom_call.1} parent=1 // pred_check_branch
      %24 = sbr.rel (0) target = $region9
    $region8: #{tpu_custom_call.1} parent=1 // pred_region
      %s26 = ssub.s32 512, 512
      %27 = vsyncadd [#allocation6], %s26
      %s28 = sshll.u32 [#allocation5], 4
      %s29 = int_to_ptr.vmem [resolvable:$true] %s28
      %34 = dma.hbm_to_vmem [thread:$0]  %s1, 512, %s29, [#allocation6], 128, 128, 8
    $region9: #{tpu_custom_call.1} parent=1 // pred_fallthru
      _
    // Predicated region
    $region10: #{tpu_custom_call.1} parent=1 // pred_check
      _
    $region11: #{tpu_custom_call.1} parent=1 // pred_check_branch
      %36 = sbr.rel (0) target = $region13
    $region12: #{tpu_custom_call.1} parent=1 // pred_region
      _
    $region13: #{tpu_custom_call.1} parent=1 // pred_fallthru
      _
    // Predicated region
    $region14: #{tpu_custom_call.1} parent=1 // pred_check
      _
    $region15: #{tpu_custom_call.1} parent=1 // pred_check_branch
      %38 = sbr.rel (0) target = $region17
    $region16: #{tpu_custom_call.1} parent=1 // pred_region
      %39 = dma.done [#allocation3], 256
    $region17: #{tpu_custom_call.1} parent=1 // pred_fallthru
      _
    // Predicated region
    $region18: #{tpu_custom_call.1} parent=1 // pred_check
      _
    $region19: #{tpu_custom_call.1} parent=1 // pred_check_branch
      %41 = sbr.rel (0) target = $region21
    $region20: #{tpu_custom_call.1} parent=1 // pred_region
      %42 = dma.done [#allocation6], 512
    $region21: #{tpu_custom_call.1} parent=1 // pred_fallthru
      _
    %v43 = vld [vmem:[#allocation2] sm:$0xff]
    %v44 = vld [vmem:[#allocation2 + $0x8] sm:$0xff]
    %v45 = vld [vmem:[#allocation5] sm:$0xff]
    %v46 = vld [vmem:[#allocation5 + $0x8] sm:$0xff]
    %v47 = vld [vmem:[#allocation5 + $0x10] sm:$0xff]
    %v48 = vld [vmem:[#allocation5 + $0x18] sm:$0xff]
    %v49 = vld [vmem:[%s2] sm:$0x1]
    %v51 = vlaneseq
    %v52 = vshrl.u32 %v51, 7
    %v53 = vsub.s32 0, %v52
    %v54 = vrot.slane %v49, %v53
    %vm56 = vcmask 261120
    %v58 = vsel %vm56, %v43, 0
    %v61 = vsel %vm56, %v44, 0
    %63 = vmatprep.subr.mxu0 0.0
    %64 = vmatpush1.msra.mxu0 0.0
    %65 = vmatprep.subr.mxu0 0.0
    %66 = vmatpush1.msra.mxu0 0.0
    %67 = vmatprep.subr.mxu0 0.0
    %68 = vmatpush1.msra.mxu0 0.0
    %69 = vmatprep.subr.mxu0 0.0
    %70 = vmatpush1.msra.mxu0 0.0
    %71 = vmatprep.subr.mxu0 0.0
    %72 = vmatpush1.msra.mxu0 0.0
    %73 = vmatprep.subr.mxu0 0.0
    %74 = vmatpush1.msra.mxu0 0.0
    %75 = vmatprep.subr.mxu0 0.0
    %76 = vmatpush1.msra.mxu0 0.0
    %77 = vmatprep.subr.mxu0 0.0
    %78 = vmatpush1.msra.mxu0 0.0
    %79 = vmatprep.subr.mxu0 0.0
    %80 = vmatpush1.msra.mxu0 0.0
    %81 = vmatprep.subr.mxu0 0.0
    %82 = vmatpush1.msra.mxu0 0.0
    %83 = vmatprep.subr.mxu0 0.0
    %84 = vmatpush1.msra.mxu0 0.0
    %85 = vmatprep.subr.mxu0 0.0
    %86 = vmatpush1.msra.mxu0 0.0
    %87 = vmatprep.subr.mxu0 0.0
    %88 = vmatpush1.msra.mxu0 %v48
    %89 = vmatprep.subr.mxu0 0.0
    %90 = vmatpush1.msra.mxu0 %v47
    %91 = vmatprep.subr.mxu0 0.0
    %92 = vmatpush1.msra.mxu0 %v46
    %93 = vmatprep.subr.mxu0 0.0
    %94 = vmatpush1.msra.mxu0 %v45
    %95 = vmatprep.subr.mxu0 0.0
    %96 = vmatpush2.msra.mxu0 0.0
    %97 = vmatprep.subr.mxu0 0.0
    %98 = vmatpush2.msra.mxu0 0.0
    %99 = vmatprep.subr.mxu0 0.0
    %100 = vmatpush2.msra.mxu0 0.0
    %101 = vmatprep.subr.mxu0 0.0
    %102 = vmatpush2.msra.mxu0 0.0
    %103 = vmatprep.subr.mxu0 0.0
    %104 = vmatpush2.msra.mxu0 0.0
    %105 = vmatprep.subr.mxu0 0.0
    %106 = vmatpush2.msra.mxu0 0.0
    %107 = vmatprep.subr.mxu0 0.0
    %108 = vmatpush2.msra.mxu0 0.0
    %109 = vmatprep.subr.mxu0 0.0
    %110 = vmatpush2.msra.mxu0 0.0
    %111 = vmatprep.subr.mxu0 0.0
    %112 = vmatpush2.msra.mxu0 0.0
    %113 = vmatprep.subr.mxu0 0.0
    %114 = vmatpush2.msra.mxu0 0.0
    %115 = vmatprep.subr.mxu0 0.0
    %116 = vmatpush2.msra.mxu0 0.0
    %117 = vmatprep.subr.mxu0 0.0
    %118 = vmatpush2.msra.mxu0 0.0
    %119 = vmatprep.subr.mxu0 0.0
    %120 = vmatpush2.msra.mxu0 0.0
    %121 = vmatprep.subr.mxu0 0.0
    %122 = vmatpush2.msra.mxu0 0.0
    %123 = vmatprep.subr.mxu0 0.0
    %124 = vmatpush2.msra.mxu0 0.0
    %125 = vmatprep.subr.mxu0 0.0
    %126 = vmatpush2.msra.mxu0 0.0
    %127 = vmatprep.mubr.f32.mxu0 0.0
    %128 = vmatmul.mubr.f32.gmra.mxu0 %v58
    %v129 = vpop.f32.mrf.mxu0
    %v130 = vadd.f32 %v54, %v129
    %v131 = vpop.f32.mrf.mxu0
    %132 = vmatprep.mubr.f32.mxu0 0.0
    %133 = vmatmul.mubr.f32.gmra.mxu0 %v61
    %v134 = vpop.f32.mrf.mxu0
    %v135 = vadd.f32 %v54, %v134
    %v136 = vpop.f32.mrf.mxu0
    %137 = vdwg.mxu0
    %vm138 = vcmask 523264
    %139 = vst.msk [vmem:[#allocation7] sm:$0xff] %vm138, %v130
    %140 = vst.msk [vmem:[#allocation7 + $0x8] sm:$0xff] %vm138, %v135
    // Predicated region
    $region22: #{tpu_custom_call.1} parent=1 // pred_check
      _
    $region23: #{tpu_custom_call.1} parent=1 // pred_check_branch
      %142 = sbr.rel (0) target = $region25
    $region24: #{tpu_custom_call.1} parent=1 // pred_region
      %s144 = ssub.s32 256, 256
      %145 = vsyncadd [#allocation4], %s144
      %s146 = sshll.u32 [#allocation7], 4
      %s147 = int_to_ptr.vmem [resolvable:$true] %s146
      %152 = dma.vmem_to_hbm [thread:$0]  %s147, 256, %s3, [#allocation4], 128, 128, 8
    $region25: #{tpu_custom_call.1} parent=1 // pred_fallthru
      _
    // Predicated region
    $region26: #{tpu_custom_call.1} parent=1 // pred_check
      _
    $region27: #{tpu_custom_call.1} parent=1 // pred_check_branch
      %154 = sbr.rel (0) target = $region29
    $region28: #{tpu_custom_call.1} parent=1 // pred_region
      %155 = dma.done [#allocation4], 256
    $region29: #{tpu_custom_call.1} parent=1 // pred_fallthru
      _
    %156 = vsyncpa [#allocation3], 1
    %157 = vsyncpa [#allocation6], 1
    %158 = vsyncpa [#allocation4], 1

</llo_original>
